<compile_context>
chip_gen: v7x
topology: tpu7x:2x2x1
jax: 0.10.0
libtpu: 0.0.40
codegen_flags: <defaults>
</compile_context>

<pallas_src>
import jax
import jax.numpy as jnp
from jax.experimental import pallas as pl
from jax.experimental.pallas import tpu as pltpu

HIDDEN_LOGICAL = 300  # matches SafeCritic default
SUBLANE = 16          # bf16 sublane packing -> batch-tile alignment


def _round_up(n, m):
    return (n + m - 1) // m * m


def _safe_critic_kernel(x_ref, w1_ref, b1_ref, w2_ref, b2_ref, w3_ref, b3_ref,
                        o_ref):
    # Layer 1: bf16 MXU matmul, f32 accumulation, f32 bias + ReLU.
    h1 = jnp.dot(x_ref[...], w1_ref[...], preferred_element_type=jnp.float32)
    h1 = jnp.maximum(h1 + b1_ref[...], 0.0)

    # Layer 2: same (feed bf16 into the MXU, keep elementwise math f32).
    h2 = jnp.dot(h1.astype(jnp.bfloat16), w2_ref[...],
                 preferred_element_type=jnp.float32)
    h2 = jnp.maximum(h2 + b2_ref[...], 0.0)

    # Layer 3 (out_features == 1): lane-wise multiply + cross-lane reduce on
    # VPU/XLU instead of a nearly-empty N=1 MXU tile. The 1-D result is
    # lane-major, so the store below is a full-lane (unmasked) store.
    y = jnp.sum(h2 * w3_ref[...], axis=-1) + b3_ref[0]          # (TB,)
    o_ref[...] = jax.nn.sigmoid(y).reshape(o_ref.shape).astype(o_ref.dtype)


def controller_safe_model_forward(x, params, *, tile_b=1024, xla_small_batch=0):
    """x: (B, state_dim) f32. params: dict produced by init_params().

    tile_b: max batch-tile size (largest-that-fits; working set stays << VMEM).
    xla_small_batch: if B <= this, skip Pallas and use plain XLA (the call is
      launch/DMA dominated for tiny control-loop batches). Default 0 so the
      Pallas path is always exercised; ~128 is a reasonable production value.
    """
    w1, b1 = params["w1"], params["b1"]
    w2, b2 = params["w2"], params["b2"]
    w3, b3 = params["w3"], params["b3"]
    B, S = x.shape
    H = w1.shape[1]

    if B <= xla_small_batch:
        return reference_forward(x, params)

    # bf16 activations: halves the only per-step streamed DMA.
    x = x.astype(jnp.bfloat16)

    # Adaptive batch tiling: align to the bf16 sublane pack (16), cap the tile
    # at ~half the batch so the "parallel" grid has >= 2 steps when possible
    # (v7x megacore), and avoid padding B up to a full oversized tile.
    B_al = _round_up(B, SUBLANE)
    if B_al >= 2 * SUBLANE:
        tb_cap = _round_up((B_al + 1) // 2, SUBLANE)
    else:
        tb_cap = B_al
    TB = _round_up(max(SUBLANE, min(tile_b, tb_cap)), SUBLANE)
    B_pad = _round_up(B_al, TB)
    if B_pad != B:
        x = jnp.pad(x, ((0, B_pad - B), (0, 0)))
    n_tiles = B_pad // TB

    out = pl.pallas_call(
        _safe_critic_kernel,
        # Lane-dense output: (n_tiles, 1, TB) with the batch along lanes.
        out_shape=jax.ShapeDtypeStruct((n_tiles, 1, TB), jnp.float32),
        grid=(n_tiles,),
        in_specs=[
            pl.BlockSpec((TB, S), lambda i: (i, 0)),            # x: batch-tiled
            pl.BlockSpec((S, H), lambda i: (0, 0)),             # w1: resident
            pl.BlockSpec((1, H), lambda i: (0, 0)),             # b1: resident
            pl.BlockSpec((H, H), lambda i: (0, 0)),             # w2: resident
            pl.BlockSpec((1, H), lambda i: (0, 0)),             # b2: resident
            pl.BlockSpec((1, H), lambda i: (0, 0)),             # w3 row: resident
            pl.BlockSpec(memory_space=pltpu.MemorySpace.SMEM),  # b3 scalar
        ],
        out_specs=pl.BlockSpec((1, 1, TB), lambda i: (i, 0, 0)),
        compiler_params=pltpu.CompilerParams(
            dimension_semantics=("parallel",)),
    )(x, w1, b1, w2, b2, w3, b3)

    return out.reshape(-1)[:B].reshape(B, 1)


def init_params(state_dim, hidden_dim=HIDDEN_LOGICAL, seed=0):
    """Init mimicking torch.nn.Linear default (U(-k, k), k=1/sqrt(fan_in)).

    Weights are stored as (in_features, out_features) (transposed vs PyTorch),
    zero-padded on the hidden axis to a multiple of 128; W1/W2 are cast to
    bf16. W3 is a (1, H) f32 row (padded cols are zero). The pre-cast f32
    unpadded weights are kept under params["f32"] for drift validation.
    """
    key = jax.random.PRNGKey(seed)
    ks = jax.random.split(key, 6)
    H = _round_up(hidden_dim, 128)
    pad_h = H - hidden_dim

    def lin(kw, kb, fan_in, fan_out):
        bound = 1.0 / jnp.sqrt(jnp.float32(fan_in))
        w = jax.random.uniform(kw, (fan_in, fan_out), jnp.float32,
                               minval=-bound, maxval=bound)
        b = jax.random.uniform(kb, (1, fan_out), jnp.float32,
                               minval=-bound, maxval=bound)
        return w, b

    w1, b1 = lin(ks[0], ks[1], state_dim, hidden_dim)
    w2, b2 = lin(ks[2], ks[3], hidden_dim, hidden_dim)
    w3, b3 = lin(ks[4], ks[5], hidden_dim, 1)

    f32 = {"w1": w1, "b1": b1.reshape(-1), "w2": w2, "b2": b2.reshape(-1),
           "w3": w3, "b3": b3.reshape(-1)}

    # Zero-pad hidden 300 -> H (ReLU-invariant; padded w3 lanes are zero).
    w1p = jnp.pad(w1, ((0, 0), (0, pad_h)))
    b1p = jnp.pad(b1, ((0, 0), (0, pad_h)))
    w2p = jnp.pad(w2, ((0, pad_h), (0, pad_h)))
    b2p = jnp.pad(b2, ((0, 0), (0, pad_h)))
    w3_row = jnp.pad(w3.T, ((0, 0), (0, pad_h)))   # (1, H)

    return {
        "w1": w1p.astype(jnp.bfloat16), "b1": b1p,
        "w2": w2p.astype(jnp.bfloat16), "b2": b2p,
        "w3": w3_row, "b3": b3.reshape(1),
        "f32": f32,
    }


def reference_forward(x, params):
    """Pure-JAX reference using the same (padded, bf16) parameters."""
    h1 = jnp.maximum(
        jnp.dot(x.astype(jnp.bfloat16), params["w1"],
                preferred_element_type=jnp.float32) + params["b1"], 0.0)
    h2 = jnp.maximum(
        jnp.dot(h1.astype(jnp.bfloat16), params["w2"],
                preferred_element_type=jnp.float32) + params["b2"], 0.0)
    y = jnp.sum(h2 * params["w3"], axis=-1, keepdims=True) + params["b3"]
    return jax.nn.sigmoid(y)


def reference_forward_f32(x, p32):
    """Full-f32 reference (matches the original PyTorch module exactly)."""
    h1 = jnp.maximum(x @ p32["w1"] + p32["b1"], 0.0)
    h2 = jnp.maximum(h1 @ p32["w2"] + p32["b2"], 0.0)
    return jax.nn.sigmoid(h2 @ p32["w3"] + p32["b3"])


if __name__ == "__main__":
    batch = 16
    state_dim = 32

    key = jax.random.PRNGKey(0)
    x = jax.random.normal(key, (batch, state_dim), dtype=jnp.float32)
    params = init_params(state_dim, seed=0)

    out = jax.block_until_ready(controller_safe_model_forward(x, params))
    assert out.shape == (batch, 1), out.shape

    # Exact check vs a reference using the same bf16/padded params.
    ref = reference_forward(x, params)
    assert jnp.allclose(out, ref, atol=1e-3, rtol=1e-3), (
        f"max abs err {jnp.max(jnp.abs(out - ref))}")

    # Loose drift check vs the original full-f32 model (bf16 weight rounding).
    ref32 = reference_forward_f32(x, params["f32"])
    assert jnp.allclose(out, ref32, atol=2e-2), (
        f"f32-drift max abs err {jnp.max(jnp.abs(out - ref32))}")

    # Exercise a multi-step batch grid (3 tiles of TB=16) on the parallel axis.
    x2 = jax.random.normal(jax.random.PRNGKey(1), (48, state_dim),
                           dtype=jnp.float32)
    out2 = jax.block_until_ready(
        controller_safe_model_forward(x2, params, tile_b=16))
    ref2 = reference_forward(x2, params)
    assert out2.shape == (48, 1), out2.shape
    assert jnp.allclose(out2, ref2, atol=1e-3, rtol=1e-3), (
        f"max abs err (tiled) {jnp.max(jnp.abs(out2 - ref2))}")

    print("KERNEL_OK")
</pallas_src>

<mosaic_0001>
module attributes {stable_mosaic.version = 11 : i64} {
  func.func @_safe_critic_kernel(%arg0: i32, %arg1: memref<16x32xbf16, #tpu.memory_space<vmem>>, %arg2: memref<32x384xbf16, #tpu.memory_space<vmem>>, %arg3: memref<1x384xf32, #tpu.memory_space<vmem>>, %arg4: memref<384x384xbf16, #tpu.memory_space<vmem>>, %arg5: memref<1x384xf32, #tpu.memory_space<vmem>>, %arg6: memref<1x384xf32, #tpu.memory_space<vmem>>, %arg7: memref<1xf32, #tpu.memory_space<smem>>, %arg8: memref<1x1x16xf32, #tpu.memory_space<vmem>>) attributes {dimension_semantics = [#tpu.dimension_semantics<parallel>], iteration_bounds = array<i64: 1>, scalar_prefetch = 0 : i64, scratch_operands = 0 : i64, tpu.core_type = #tpu.core_type<tc>, window_params = [{transform_indices = @transform_0, window_bounds = array<i64: 16, 32>}, {pipeline_mode = #tpu.pipeline_mode<synchronous>, transform_indices = @transform_1, window_bounds = array<i64: 32, 384>}, {pipeline_mode = #tpu.pipeline_mode<synchronous>, transform_indices = @transform_2, window_bounds = array<i64: 1, 384>}, {pipeline_mode = #tpu.pipeline_mode<synchronous>, transform_indices = @transform_3, window_bounds = array<i64: 384, 384>}, {pipeline_mode = #tpu.pipeline_mode<synchronous>, transform_indices = @transform_4, window_bounds = array<i64: 1, 384>}, {pipeline_mode = #tpu.pipeline_mode<synchronous>, transform_indices = @transform_5, window_bounds = array<i64: 1, 384>}, {transform_indices = @transform_6, window_bounds = array<i64: 1>}, {transform_indices = @transform_7, window_bounds = array<i64: 1, 1, 16>}]} {
    %c0 = arith.constant 0 : index
    %c0_0 = arith.constant 0 : index
    %0 = vector.load %arg1[%c0, %c0_0] : memref<16x32xbf16, #tpu.memory_space<vmem>>, vector<16x32xbf16>
    %c0_1 = arith.constant 0 : index
    %c0_2 = arith.constant 0 : index
    %1 = vector.load %arg2[%c0_1, %c0_2] : memref<32x384xbf16, #tpu.memory_space<vmem>>, vector<32x384xbf16>
    %cst = arith.constant dense<0.000000e+00> : vector<16x384xf32>
    %2 = tpu.matmul %0, %1, %cst {dimension_numbers = #tpu.dot_dimension_numbers<[1], [0], [0], [1], [0, 0, 1, 1], [], []>} : vector<16x32xbf16>, vector<32x384xbf16>, vector<16x384xf32> -> vector<16x384xf32>
    %c0_3 = arith.constant 0 : index
    %c0_4 = arith.constant 0 : index
    %3 = vector.load %arg3[%c0_3, %c0_4] : memref<1x384xf32, #tpu.memory_space<vmem>>, vector<1x384xf32>
    %4 = vector.broadcast %3 : vector<1x384xf32> to vector<16x384xf32>
    %5 = arith.addf %2, %4 : vector<16x384xf32>
    %cst_5 = arith.constant 0.000000e+00 : f32
    %6 = vector.broadcast %cst_5 : f32 to vector<16x384xf32>
    %7 = arith.maximumf %5, %6 : vector<16x384xf32>
    %8 = arith.truncf %7 : vector<16x384xf32> to vector<16x384xbf16>
    %c0_6 = arith.constant 0 : index
    %c0_7 = arith.constant 0 : index
    %9 = vector.load %arg4[%c0_6, %c0_7] : memref<384x384xbf16, #tpu.memory_space<vmem>>, vector<384x384xbf16>
    %cst_8 = arith.constant dense<0.000000e+00> : vector<16x384xf32>
    %10 = tpu.matmul %8, %9, %cst_8 {dimension_numbers = #tpu.dot_dimension_numbers<[1], [0], [0], [1], [0, 0, 1, 1], [], []>} : vector<16x384xbf16>, vector<384x384xbf16>, vector<16x384xf32> -> vector<16x384xf32>
    %c0_9 = arith.constant 0 : index
    %c0_10 = arith.constant 0 : index
    %11 = vector.load %arg5[%c0_9, %c0_10] : memref<1x384xf32, #tpu.memory_space<vmem>>, vector<1x384xf32>
    %12 = vector.broadcast %11 : vector<1x384xf32> to vector<16x384xf32>
    %13 = arith.addf %10, %12 : vector<16x384xf32>
    %cst_11 = arith.constant 0.000000e+00 : f32
    %14 = vector.broadcast %cst_11 : f32 to vector<16x384xf32>
    %15 = arith.maximumf %13, %14 : vector<16x384xf32>
    %c0_12 = arith.constant 0 : index
    %c0_13 = arith.constant 0 : index
    %16 = vector.load %arg6[%c0_12, %c0_13] : memref<1x384xf32, #tpu.memory_space<vmem>>, vector<1x384xf32>
    %17 = vector.broadcast %16 : vector<1x384xf32> to vector<16x384xf32>
    %18 = arith.mulf %15, %17 : vector<16x384xf32>
    %cst_14 = arith.constant dense<0.000000e+00> : vector<16xf32>
    %19 = vector.multi_reduction <add>, %18, %cst_14 [1] : vector<16x384xf32> to vector<16xf32>
    %c0_15 = arith.constant 0 : index
    %20 = memref.load %arg7[%c0_15] : memref<1xf32, #tpu.memory_space<smem>>
    %21 = vector.broadcast %20 : f32 to vector<16xf32>
    %22 = arith.addf %19, %21 : vector<16xf32>
    %23 = arith.negf %22 : vector<16xf32>
    %24 = math.exp %23 : vector<16xf32>
    %cst_16 = arith.constant 1.000000e+00 : f32
    %25 = vector.broadcast %cst_16 : f32 to vector<16xf32>
    %26 = arith.addf %25, %24 : vector<16xf32>
    %27 = arith.divf %25, %26 : vector<16xf32>
    %28 = vector.shape_cast %27 : vector<16xf32> to vector<1x1x16xf32>
    %c0_17 = arith.constant 0 : index
    %c0_18 = arith.constant 0 : index
    %c0_19 = arith.constant 0 : index
    %29 = vector.load %arg8[%c0_17, %c0_18, %c0_19] : memref<1x1x16xf32, #tpu.memory_space<vmem>>, vector<1x1x16xf32>
    tpu.vector_store %arg8[%c0_17, %c0_18, %c0_19], %28 {strides = array<i32>} : memref<1x1x16xf32, #tpu.memory_space<vmem>>, vector<1x1x16xf32>,
    return
  }
  func.func @transform_0(%arg0: i32) -> (i32, i32) {
    %c0_i32 = arith.constant 0 : i32
    %c0_i32_0 = arith.constant 0 : i32
    return %arg0, %c0_i32 : i32, i32
  }
  func.func @transform_1(%arg0: i32) -> (i32, i32) {
    %c0_i32 = arith.constant 0 : i32
    %c0_i32_0 = arith.constant 0 : i32
    %c0_i32_1 = arith.constant 0 : i32
    return %c0_i32, %c0_i32_0 : i32, i32
  }
  func.func @transform_2(%arg0: i32) -> (i32, i32) {
    %c0_i32 = arith.constant 0 : i32
    %c0_i32_0 = arith.constant 0 : i32
    %c0_i32_1 = arith.constant 0 : i32
    return %c0_i32, %c0_i32_0 : i32, i32
  }
  func.func @transform_3(%arg0: i32) -> (i32, i32) {
    %c0_i32 = arith.constant 0 : i32
    %c0_i32_0 = arith.constant 0 : i32
    %c0_i32_1 = arith.constant 0 : i32
    return %c0_i32, %c0_i32_0 : i32, i32
  }
  func.func @transform_4(%arg0: i32) -> (i32, i32) {
    %c0_i32 = arith.constant 0 : i32
    %c0_i32_0 = arith.constant 0 : i32
    %c0_i32_1 = arith.constant 0 : i32
    return %c0_i32, %c0_i32_0 : i32, i32
  }
  func.func @transform_5(%arg0: i32) -> (i32, i32) {
    %c0_i32 = arith.constant 0 : i32
    %c0_i32_0 = arith.constant 0 : i32
    %c0_i32_1 = arith.constant 0 : i32
    return %c0_i32, %c0_i32_0 : i32, i32
  }
  func.func @transform_6(%arg0: i32) -> i32 {
    %c0_i32 = arith.constant 0 : i32
    %c0_i32_0 = arith.constant 0 : i32
    return %c0_i32 : i32
  }
  func.func @transform_7(%arg0: i32) -> (i32, i32, i32) {
    %c0_i32 = arith.constant 0 : i32
    %c0_i32_0 = arith.constant 0 : i32
    %c0_i32_1 = arith.constant 0 : i32
    return %arg0, %c0_i32, %c0_i32_0 : i32, i32, i32
  }
}

</mosaic_0001>

<llo_original>
// kernel: tpu_custom_call.1
$region0: #{tpu_custom_call.1}
  #allocation0 [shape = 'u32[]', space=smem, size = 0x4, offset = 0x4, fixed_abs, tag = 'smem constant byte address 0x4 - core index']
  #allocation1 [shape = 'u32[144,128]{1,0:T(1,128)}', space=vmem, size = 0x12000, scoped, tag = 'internal scratch']
  #allocation2 [shape = 'f32[1]{0:T(128)S(6)}', space=smem, size = 0x200, scoped, tag = 'scoped memory for tpu_custom_call.1']
  %s0 = inlined_call_operand.hbm [shape: bf16[16,32], index: 0, kind: input, shape index: {}]
  %s1 = inlined_call_operand.hbm [shape: bf16[32,384], index: 1, kind: input, shape index: {}]
  %s2 = inlined_call_operand.vmem [shape: f32[1,384], index: 2, kind: input, shape index: {}]
  %s3 = inlined_call_operand.hbm [shape: bf16[384,384], index: 3, kind: input, shape index: {}]
  %s4 = inlined_call_operand.vmem [shape: f32[1,384], index: 4, kind: input, shape index: {}]
  %s5 = inlined_call_operand.vmem [shape: f32[1,384], index: 5, kind: input, shape index: {}]
  %s6 = inlined_call_operand.<no memory space> [shape: f32[1], index: 6, kind: input, shape index: {}]
  %s7 = inlined_call_operand.hbm [shape: f32[1,1,16], index: 7, kind: output, shape index: {}]
  %s8 = sld [smem:[#allocation0]]
  $region50: #{tpu_custom_call.1} parent=0
    _
  %s10 = ssub.s32 1, %s8
  %s11 = scalar_select 0, %s10, %s8
  %12 = sst [smem:[#allocation2]] %s6
  $region1: #{tpu_custom_call.1} parent=0
    #allocation3 [shape = 'u8[4096]{0}', space=vmem, size = 0x1000, scoped, tag = 'input window, operand 0, single buffered']
    #allocation4 [shape = 's32[1]{0}', space=sflag, size = 0x4, scoped, tag = 'scoped memory for tpu_custom_call.1']
    #allocation5 [shape = 's32[1]{0}', space=sflag, size = 0x4, scoped, tag = 'scoped memory for tpu_custom_call.1']
    #allocation6 [shape = 'u8[24576]{0}', space=vmem, size = 0x6000, scoped, tag = 'input window, operand 1, single buffered']
    #allocation7 [shape = 's32[1]{0}', space=sflag, size = 0x4, scoped, tag = 'scoped memory for tpu_custom_call.1']
    #allocation8 [shape = 'u8[294912]{0}', space=vmem, size = 0x48000, scoped, tag = 'input window, operand 3, single buffered']
    #allocation9 [shape = 'u8[512]{0}', space=vmem, size = 0x400, scoped, tag = 'output window, operand 0, single buffered']
    %13 = vsyncpa [#allocation4], 0
    %14 = vsyncpa [#allocation7], 0
    %15 = vsyncpa [#allocation5], 0
    // Predicated region
    $region2: #{tpu_custom_call.1} parent=1 // pred_check
      _
    $region3: #{tpu_custom_call.1} parent=1 // pred_check_branch
      %17 = sbr.rel (0) target = $region5
    $region4: #{tpu_custom_call.1} parent=1 // pred_region
      %s19 = ssub.s32 128, 128
      %20 = vsyncadd [#allocation4], %s19
      %s21 = sshll.u32 [#allocation3], 4
      %s22 = int_to_ptr.vmem [resolvable:$true] %s21
      %27 = dma.hbm_to_vmem [thread:$0]  %s0, 128, %s22, [#allocation4], 64, 64, 4
    $region5: #{tpu_custom_call.1} parent=1 // pred_fallthru
      _
    // Predicated region
    $region6: #{tpu_custom_call.1} parent=1 // pred_check
      _
    $region7: #{tpu_custom_call.1} parent=1 // pred_check_branch
      %29 = sbr.rel (0) target = $region9
    $region8: #{tpu_custom_call.1} parent=1 // pred_region
      %s31 = ssub.s32 768, 768
      %32 = vsyncadd [#allocation7], %s31
      %s33 = sshll.u32 [#allocation6], 4
      %s34 = int_to_ptr.vmem [resolvable:$true] %s33
      %39 = dma.hbm_to_vmem [thread:$0]  %s1, 768, %s34, [#allocation7], 192, 192, 12
    $region9: #{tpu_custom_call.1} parent=1 // pred_fallthru
      _
    // Predicated region
    $region10: #{tpu_custom_call.1} parent=1 // pred_check
      _
    $region11: #{tpu_custom_call.1} parent=1 // pred_check_branch
      %41 = sbr.rel (0) target = $region13
    $region12: #{tpu_custom_call.1} parent=1 // pred_region
      _
    $region13: #{tpu_custom_call.1} parent=1 // pred_fallthru
      _
    // Predicated region
    $region14: #{tpu_custom_call.1} parent=1 // pred_check
      _
    $region15: #{tpu_custom_call.1} parent=1 // pred_check_branch
      %43 = sbr.rel (0) target = $region17
    $region16: #{tpu_custom_call.1} parent=1 // pred_region
      %s45 = ssub.s32 9216, 9216
      %46 = vsyncadd [#allocation7], %s45
      %s47 = sshll.u32 [#allocation8], 4
      %s48 = int_to_ptr.vmem [resolvable:$true] %s47
      %53 = dma.hbm_to_vmem [thread:$0]  %s3, 9216, %s48, [#allocation7], 192, 192, 12
    $region17: #{tpu_custom_call.1} parent=1 // pred_fallthru
      _
    // Predicated region
    $region18: #{tpu_custom_call.1} parent=1 // pred_check
      _
    $region19: #{tpu_custom_call.1} parent=1 // pred_check_branch
      %55 = sbr.rel (0) target = $region21
    $region20: #{tpu_custom_call.1} parent=1 // pred_region
      _
    $region21: #{tpu_custom_call.1} parent=1 // pred_fallthru
      _
    // Predicated region
    $region22: #{tpu_custom_call.1} parent=1 // pred_check
      _
    $region23: #{tpu_custom_call.1} parent=1 // pred_check_branch
      %57 = sbr.rel (0) target = $region25
    $region24: #{tpu_custom_call.1} parent=1 // pred_region
      _
    $region25: #{tpu_custom_call.1} parent=1 // pred_fallthru
      _
    // Predicated region
    $region26: #{tpu_custom_call.1} parent=1 // pred_check
      _
    $region27: #{tpu_custom_call.1} parent=1 // pred_check_branch
      %59 = sbr.rel (0) target = $region29
    $region28: #{tpu_custom_call.1} parent=1 // pred_region
      _
    $region29: #{tpu_custom_call.1} parent=1 // pred_fallthru
      _
    // Predicated region
    $region30: #{tpu_custom_call.1} parent=1 // pred_check
      _
    $region31: #{tpu_custom_call.1} parent=1 // pred_check_branch
      %61 = sbr.rel (0) target = $region33
    $region32: #{tpu_custom_call.1} parent=1 // pred_region
      %62 = dma.done [#allocation4], 128
    $region33: #{tpu_custom_call.1} parent=1 // pred_fallthru
      _
    // Predicated region
    $region34: #{tpu_custom_call.1} parent=1 // pred_check
      _
    $region35: #{tpu_custom_call.1} parent=1 // pred_check_branch
      %64 = sbr.rel (0) target = $region37
    $region36: #{tpu_custom_call.1} parent=1 // pred_region
      %65 = dma.done [#allocation7], 768
    $region37: #{tpu_custom_call.1} parent=1 // pred_fallthru
      _
    // Predicated region
    $region38: #{tpu_custom_call.1} parent=1 // pred_check
      _
    $region39: #{tpu_custom_call.1} parent=1 // pred_check_branch
      %67 = sbr.rel (0) target = $region41
    $region40: #{tpu_custom_call.1} parent=1 // pred_region
      %68 = dma.done [#allocation7], 9216
    $region41: #{tpu_custom_call.1} parent=1 // pred_fallthru
      _
    %v70 = vld [vmem:[#allocation3] sm:$0xf]
    %v71 = vld [vmem:[#allocation3 + $0x4] sm:$0xf]
    %v72 = vld [vmem:[#allocation6] sm:$0xff]
    %v73 = vld [vmem:[#allocation6 + $0x8] sm:$0xf]
    %v74 = vld [vmem:[#allocation6 + $0xc] sm:$0xff]
    %v75 = vld [vmem:[#allocation6 + $0x14] sm:$0xf]
    %v76 = vld [vmem:[#allocation6 + $0x18] sm:$0xff]
    %v77 = vld [vmem:[#allocation6 + $0x20] sm:$0xf]
    %v78 = vld [vmem:[#allocation6 + $0x24] sm:$0xff]
    %v79 = vld [vmem:[#allocation6 + $0x2c] sm:$0xf]
    %v80 = vld [vmem:[%s2] sm:$0x7]
    %v82 = vlaneseq
    %v83 = vshrl.u32 %v82, 7
    %v84 = vsub.s32 0, %v83
    %v85 = vrot.slane %v80, %v84
    %v86 = vlaneseq
    %v87 = vshrl.u32 %v86, 7
    %v88 = vsub.s32 1, %v87
    %v89 = vrot.slane %v80, %v88
    %v90 = vlaneseq
    %v91 = vshrl.u32 %v90, 7
    %v92 = vsub.s32 2, %v91
    %v93 = vrot.slane %v80, %v92
    %v99 = vunpack.c.l.b16 %v70
    %v100 = vunpack.c.l.b16 %v71
    %v101 = vpack.c.b16 %v100, %v99
    %v110 = vunpack.c.l.b16 %v72
    %v111 = vunpack.c.h.b16 %v72
    %v112 = vunpack.c.l.b16 %v73
    %v113 = vunpack.c.l.b16 %v74
    %v114 = vunpack.c.h.b16 %v74
    %v115 = vunpack.c.l.b16 %v75
    %v116 = vunpack.c.l.b16 %v76
    %v117 = vunpack.c.h.b16 %v76
    %v118 = vunpack.c.l.b16 %v77
    %v119 = vunpack.c.l.b16 %v78
    %v120 = vunpack.c.h.b16 %v78
    %v121 = vunpack.c.l.b16 %v79
    %v122 = vpack.c.b16 %v113, %v110
    %v123 = vpack.c.b16 %v114, %v111
    %v124 = vpack.c.b16 %v115, %v112
    %v125 = vpack.c.b16 %v119, %v116
    %v126 = vpack.c.b16 %v120, %v117
    %v127 = vpack.c.b16 %v121, %v118
    %vm134 = vcmask 261120
    %v136 = vsel %vm134, %v101, 0
    %138 = vmatprep.subr.bf16.mxu0 %v123
    %139 = vmatpush1.bf16.msra.mxu0 %v122
    %140 = vmatprep.subr.bf16.mxu0 %v126
    %141 = vmatpush1.bf16.msra.mxu0 %v125
    %142 = vmatprep.subr.bf16.mxu0 0
    %143 = vmatpush1.bf16.msra.mxu0 0
    %144 = vmatprep.subr.bf16.mxu0 0
    %145 = vmatpush1.bf16.msra.mxu0 0
    %146 = vmatprep.subr.bf16.mxu0 0
    %147 = vmatpush1.bf16.msra.mxu0 0
    %148 = vmatprep.subr.bf16.mxu0 0
    %149 = vmatpush1.bf16.msra.mxu0 0
    %150 = vmatprep.subr.bf16.mxu0 0
    %151 = vmatpush1.bf16.msra.mxu0 0
    %152 = vmatprep.subr.bf16.mxu0 0
    %153 = vmatpush1.bf16.msra.mxu0 0
    %154 = vmatprep.subr.bf16.mxu0 0
    %155 = vmatpush1.bf16.msra.mxu0 0
    %156 = vmatprep.subr.bf16.mxu0 0
    %157 = vmatpush1.bf16.msra.mxu0 0
    %158 = vmatprep.subr.bf16.mxu0 0
    %159 = vmatpush1.bf16.msra.mxu0 0
    %160 = vmatprep.subr.bf16.mxu0 0
    %161 = vmatpush1.bf16.msra.mxu0 0
    %162 = vmatprep.subr.bf16.mxu0 0
    %163 = vmatpush1.bf16.msra.mxu0 0
    %164 = vmatprep.subr.bf16.mxu0 0
    %165 = vmatpush1.bf16.msra.mxu0 0
    %166 = vmatprep.subr.bf16.mxu0 0
    %167 = vmatpush1.bf16.msra.mxu0 0
    %168 = vmatprep.subr.bf16.mxu0 0
    %169 = vmatpush1.bf16.msra.mxu0 0
    %170 = vmatprep.mubr.bf16.mxu0 0
    %171 = vmatmul.mubr.bf16.gmra.mrb[0].mxu0 %v136
    %v172 = vpop.f32.mrb[0].mxu0
    %v173 = vadd.f32 %v85, %v172
    %v174 = vpop.f32.mrb[0].mxu0
    %v175 = vadd.f32 %v89, %v174
    %v176 = vpop.f32.mrb[0].mxu0
    %v177 = vadd.f32 %v85, %v176
    %v178 = vpop.f32.mrb[0].mxu0
    %v179 = vadd.f32 %v89, %v178
    %180 = vdwg.mxu0
    %181 = vmatprep.subr.bf16.mxu0 0
    %182 = vmatpush1.bf16.msra.mxu0 %v124
    %183 = vmatprep.subr.bf16.mxu0 0
    %184 = vmatpush1.bf16.msra.mxu0 %v127
    %185 = vmatprep.subr.bf16.mxu0 0
    %186 = vmatpush1.bf16.msra.mxu0 0
    %187 = vmatprep.subr.bf16.mxu0 0
    %188 = vmatpush1.bf16.msra.mxu0 0
    %189 = vmatprep.subr.bf16.mxu0 0
    %190 = vmatpush1.bf16.msra.mxu0 0
    %191 = vmatprep.subr.bf16.mxu0 0
    %192 = vmatpush1.bf16.msra.mxu0 0
    %193 = vmatprep.subr.bf16.mxu0 0
    %194 = vmatpush1.bf16.msra.mxu0 0
    %195 = vmatprep.subr.bf16.mxu0 0
    %196 = vmatpush1.bf16.msra.mxu0 0
    %197 = vmatprep.subr.bf16.mxu0 0
    %198 = vmatpush1.bf16.msra.mxu0 0
    %199 = vmatprep.subr.bf16.mxu0 0
    %200 = vmatpush1.bf16.msra.mxu0 0
    %201 = vmatprep.subr.bf16.mxu0 0
    %202 = vmatpush1.bf16.msra.mxu0 0
    %203 = vmatprep.subr.bf16.mxu0 0
    %204 = vmatpush1.bf16.msra.mxu0 0
    %205 = vmatprep.subr.bf16.mxu0 0
    %206 = vmatpush1.bf16.msra.mxu0 0
    %207 = vmatprep.subr.bf16.mxu0 0
    %208 = vmatpush1.bf16.msra.mxu0 0
    %209 = vmatprep.subr.bf16.mxu0 0
    %210 = vmatpush1.bf16.msra.mxu0 0
    %211 = vmatprep.subr.bf16.mxu0 0
    %212 = vmatpush1.bf16.msra.mxu0 0
    %213 = vmatprep.mubr.bf16.mxu0 0
    %214 = vmatmul.mubr.bf16.gmra.mrb[0].mxu0 %v136
    %v215 = vpop.f32.mrb[0].mxu0
    %v216 = vadd.f32 %v93, %v215
    %v217 = vpop.f32.mrb[0].mxu0
    %v218 = vpop.f32.mrb[0].mxu0
    %v219 = vadd.f32 %v93, %v218
    %v220 = vpop.f32.mrb[0].mxu0
    %221 = vdwg.mxu0
    %v222 = vmax.f32 %v173, 0.0
    %v223 = vmax.f32 %v175, 0.0
    %v224 = vmax.f32 %v216, 0.0
    %v225 = vmax.f32 %v177, 0.0
    %v226 = vmax.f32 %v179, 0.0
    %v227 = vmax.f32 %v219, 0.0
    %v228 = vpack.c.bf16 %v225, %v222
    %v229 = vpack.c.bf16 %v226, %v223
    %v230 = vpack.c.bf16 %v227, %v224
    %v231 = vld [vmem:[#allocation8] sm:$0xff]
    %v232 = vld [vmem:[#allocation8 + $0x8] sm:$0xf]
    %v233 = vld [vmem:[#allocation8 + $0xc] sm:$0xff]
    %v234 = vld [vmem:[#allocation8 + $0x14] sm:$0xf]
    %v235 = vld [vmem:[#allocation8 + $0x18] sm:$0xff]
    %v236 = vld [vmem:[#allocation8 + $0x20] sm:$0xf]
    %v237 = vld [vmem:[#allocation8 + $0x24] sm:$0xff]
    %v238 = vld [vmem:[#allocation8 + $0x2c] sm:$0xf]
    %v239 = vld [vmem:[#allocation8 + $0x30] sm:$0xff]
    %v240 = vld [vmem:[#allocation8 + $0x38] sm:$0xf]
    %v241 = vld [vmem:[#allocation8 + $0x3c] sm:$0xff]
    %v242 = vld [vmem:[#allocation8 + $0x44] sm:$0xf]
    %v243 = vld [vmem:[#allocation8 + $0x48] sm:$0xff]
    %v244 = vld [vmem:[#allocation8 + $0x50] sm:$0xf]
    %v245 = vld [vmem:[#allocation8 + $0x54] sm:$0xff]
    %v246 = vld [vmem:[#allocation8 + $0x5c] sm:$0xf]
    %v247 = vld [vmem:[#allocation8 + $0x60] sm:$0xff]
    %v248 = vld [vmem:[#allocation8 + $0x68] sm:$0xf]
    %v249 = vld [vmem:[#allocation8 + $0x6c] sm:$0xff]
    %v250 = vld [vmem:[#allocation8 + $0x74] sm:$0xf]
    %v251 = vld [vmem:[#allocation8 + $0x78] sm:$0xff]
    %v252 = vld [vmem:[#allocation8 + $0x80] sm:$0xf]
    %v253 = vld [vmem:[#allocation8 + $0x84] sm:$0xff]
    %v254 = vld [vmem:[#allocation8 + $0x8c] sm:$0xf]
    %v255 = vld [vmem:[#allocation8 + $0x90] sm:$0xff]
    %v256 = vld [vmem:[#allocation8 + $0x98] sm:$0xf]
    %v257 = vld [vmem:[#allocation8 + $0x9c] sm:$0xff]
    %v258 = vld [vmem:[#allocation8 + $0xa4] sm:$0xf]
    %v259 = vld [vmem:[#allocation8 + $0xa8] sm:$0xff]
    %v260 = vld [vmem:[#allocation8 + $0xb0] sm:$0xf]
    %v261 = vld [vmem:[#allocation8 + $0xb4] sm:$0xff]
    %v262 = vld [vmem:[#allocation8 + $0xbc] sm:$0xf]
    %v263 = vld [vmem:[#allocation8 + $0xc0] sm:$0xff]
    %v264 = vld [vmem:[#allocation8 + $0xc8] sm:$0xf]
    %v265 = vld [vmem:[#allocation8 + $0xcc] sm:$0xff]
    %v266 = vld [vmem:[#allocation8 + $0xd4] sm:$0xf]
    %v267 = vld [vmem:[#allocation8 + $0xd8] sm:$0xff]
    %v268 = vld [vmem:[#allocation8 + $0xe0] sm:$0xf]
    %v269 = vld [vmem:[#allocation8 + $0xe4] sm:$0xff]
    %v270 = vld [vmem:[#allocation8 + $0xec] sm:$0xf]
    %v271 = vld [vmem:[#allocation8 + $0xf0] sm:$0xff]
    %v272 = vld [vmem:[#allocation8 + $0xf8] sm:$0xf]
    %v273 = vld [vmem:[#allocation8 + $0xfc] sm:$0xff]
    %v274 = vld [vmem:[#allocation8 + $0x104] sm:$0xf]
    %v275 = vld [vmem:[#allocation8 + $0x108] sm:$0xff]
    %v276 = vld [vmem:[#allocation8 + $0x110] sm:$0xf]
    %v277 = vld [vmem:[#allocation8 + $0x114] sm:$0xff]
    %v278 = vld [vmem:[#allocation8 + $0x11c] sm:$0xf]
    %v279 = vld [vmem:[#allocation8 + $0x120] sm:$0xff]
    %v280 = vld [vmem:[#allocation8 + $0x128] sm:$0xf]
    %v281 = vld [vmem:[#allocation8 + $0x12c] sm:$0xff]
    %v282 = vld [vmem:[#allocation8 + $0x134] sm:$0xf]
    %v283 = vld [vmem:[#allocation8 + $0x138] sm:$0xff]
    %v284 = vld [vmem:[#allocation8 + $0x140] sm:$0xf]
    %v285 = vld [vmem:[#allocation8 + $0x144] sm:$0xff]
    %v286 = vld [vmem:[#allocation8 + $0x14c] sm:$0xf]
    %v287 = vld [vmem:[#allocation8 + $0x150] sm:$0xff]
    %v288 = vld [vmem:[#allocation8 + $0x158] sm:$0xf]
    %v289 = vld [vmem:[#allocation8 + $0x15c] sm:$0xff]
    %v290 = vld [vmem:[#allocation8 + $0x164] sm:$0xf]
    %v291 = vld [vmem:[#allocation8 + $0x168] sm:$0xff]
    %v292 = vld [vmem:[#allocation8 + $0x170] sm:$0xf]
    %v293 = vld [vmem:[#allocation8 + $0x174] sm:$0xff]
    %v294 = vld [vmem:[#allocation8 + $0x17c] sm:$0xf]
    %v295 = vld [vmem:[#allocation8 + $0x180] sm:$0xff]
    %v296 = vld [vmem:[#allocation8 + $0x188] sm:$0xf]
    %v297 = vld [vmem:[#allocation8 + $0x18c] sm:$0xff]
    %v298 = vld [vmem:[#allocation8 + $0x194] sm:$0xf]
    %v299 = vld [vmem:[#allocation8 + $0x198] sm:$0xff]
    %v300 = vld [vmem:[#allocation8 + $0x1a0] sm:$0xf]
    %v301 = vld [vmem:[#allocation8 + $0x1a4] sm:$0xff]
    %v302 = vld [vmem:[#allocation8 + $0x1ac] sm:$0xf]
    %v303 = vld [vmem:[#allocation8 + $0x1b0] sm:$0xff]
    %v304 = vld [vmem:[#allocation8 + $0x1b8] sm:$0xf]
    %v305 = vld [vmem:[#allocation8 + $0x1bc] sm:$0xff]
    %v306 = vld [vmem:[#allocation8 + $0x1c4] sm:$0xf]
    %v307 = vld [vmem:[#allocation8 + $0x1c8] sm:$0xff]
    %v308 = vld [vmem:[#allocation8 + $0x1d0] sm:$0xf]
    %v309 = vld [vmem:[#allocation8 + $0x1d4] sm:$0xff]
    %v310 = vld [vmem:[#allocation8 + $0x1dc] sm:$0xf]
    %v311 = vld [vmem:[#allocation8 + $0x1e0] sm:$0xff]
    %v312 = vld [vmem:[#allocation8 + $0x1e8] sm:$0xf]
    %v313 = vld [vmem:[#allocation8 + $0x1ec] sm:$0xff]
    %v314 = vld [vmem:[#allocation8 + $0x1f4] sm:$0xf]
    %v315 = vld [vmem:[#allocation8 + $0x1f8] sm:$0xff]
    %v316 = vld [vmem:[#allocation8 + $0x200] sm:$0xf]
    %v317 = vld [vmem:[#allocation8 + $0x204] sm:$0xff]
    %v318 = vld [vmem:[#allocation8 + $0x20c] sm:$0xf]
    %v319 = vld [vmem:[#allocation8 + $0x210] sm:$0xff]
    %v320 = vld [vmem:[#allocation8 + $0x218] sm:$0xf]
    %v321 = vld [vmem:[#allocation8 + $0x21c] sm:$0xff]
    %v322 = vld [vmem:[#allocation8 + $0x224] sm:$0xf]
    %v323 = vld [vmem:[#allocation8 + $0x228] sm:$0xff]
    %v324 = vld [vmem:[#allocation8 + $0x230] sm:$0xf]
    %v325 = vld [vmem:[#allocation8 + $0x234] sm:$0xff]
    %v326 = vld [vmem:[#allocation8 + $0x23c] sm:$0xf]
    %v327 = vld [vmem:[%s4] sm:$0x7]
    %v329 = vlaneseq
    %v330 = vshrl.u32 %v329, 7
    %v331 = vsub.s32 0, %v330
    %v332 = vrot.slane %v327, %v331
    %v333 = vlaneseq
    %v334 = vshrl.u32 %v333, 7
    %v335 = vsub.s32 1, %v334
    %v336 = vrot.slane %v327, %v335
    %v337 = vlaneseq
    %v338 = vshrl.u32 %v337, 7
    %v339 = vsub.s32 2, %v338
    %v340 = vrot.slane %v327, %v339
    %v440 = vunpack.c.l.b16 %v231
    %v441 = vunpack.c.h.b16 %v231
    %v442 = vunpack.c.l.b16 %v232
    %v443 = vunpack.c.l.b16 %v233
    %v444 = vunpack.c.h.b16 %v233
    %v445 = vunpack.c.l.b16 %v234
    %v446 = vunpack.c.l.b16 %v235
    %v447 = vunpack.c.h.b16 %v235
    %v448 = vunpack.c.l.b16 %v236
    %v449 = vunpack.c.l.b16 %v237
    %v450 = vunpack.c.h.b16 %v237
    %v451 = vunpack.c.l.b16 %v238
    %v452 = vunpack.c.l.b16 %v239
    %v453 = vunpack.c.h.b16 %v239
    %v454 = vunpack.c.l.b16 %v240
    %v455 = vunpack.c.l.b16 %v241
    %v456 = vunpack.c.h.b16 %v241
    %v457 = vunpack.c.l.b16 %v242
    %v458 = vunpack.c.l.b16 %v243
    %v459 = vunpack.c.h.b16 %v243
    %v460 = vunpack.c.l.b16 %v244
    %v461 = vunpack.c.l.b16 %v245
    %v462 = vunpack.c.h.b16 %v245
    %v463 = vunpack.c.l.b16 %v246
    %v464 = vunpack.c.l.b16 %v247
    %v465 = vunpack.c.h.b16 %v247
    %v466 = vunpack.c.l.b16 %v248
    %v467 = vunpack.c.l.b16 %v249
    %v468 = vunpack.c.h.b16 %v249
    %v469 = vunpack.c.l.b16 %v250
    %v470 = vunpack.c.l.b16 %v251
    %v471 = vunpack.c.h.b16 %v251
    %v472 = vunpack.c.l.b16 %v252
    %v473 = vunpack.c.l.b16 %v253
    %v474 = vunpack.c.h.b16 %v253
    %v475 = vunpack.c.l.b16 %v254
    %v476 = vunpack.c.l.b16 %v255
    %v477 = vunpack.c.h.b16 %v255
    %v478 = vunpack.c.l.b16 %v256
    %v479 = vunpack.c.l.b16 %v257
    %v480 = vunpack.c.h.b16 %v257
    %v481 = vunpack.c.l.b16 %v258
    %v482 = vunpack.c.l.b16 %v259
    %v483 = vunpack.c.h.b16 %v259
    %v484 = vunpack.c.l.b16 %v260
    %v485 = vunpack.c.l.b16 %v261
    %v486 = vunpack.c.h.b16 %v261
    %v487 = vunpack.c.l.b16 %v262
    %v488 = vunpack.c.l.b16 %v263
    %v489 = vunpack.c.h.b16 %v263
    %v490 = vunpack.c.l.b16 %v264
    %v491 = vunpack.c.l.b16 %v265
    %v492 = vunpack.c.h.b16 %v265
    %v493 = vunpack.c.l.b16 %v266
    %v494 = vunpack.c.l.b16 %v267
    %v495 = vunpack.c.h.b16 %v267
    %v496 = vunpack.c.l.b16 %v268
    %v497 = vunpack.c.l.b16 %v269
    %v498 = vunpack.c.h.b16 %v269
    %v499 = vunpack.c.l.b16 %v270
    %v500 = vunpack.c.l.b16 %v271
    %v501 = vunpack.c.h.b16 %v271
    %v502 = vunpack.c.l.b16 %v272
    %v503 = vunpack.c.l.b16 %v273
    %v504 = vunpack.c.h.b16 %v273
    %v505 = vunpack.c.l.b16 %v274
    %v506 = vunpack.c.l.b16 %v275
    %v507 = vunpack.c.h.b16 %v275
    %v508 = vunpack.c.l.b16 %v276
    %v509 = vunpack.c.l.b16 %v277
    %v510 = vunpack.c.h.b16 %v277
    %v511 = vunpack.c.l.b16 %v278
    %v512 = vunpack.c.l.b16 %v279
    %v513 = vunpack.c.h.b16 %v279
    %v514 = vunpack.c.l.b16 %v280
    %v515 = vunpack.c.l.b16 %v281
    %v516 = vunpack.c.h.b16 %v281
    %v517 = vunpack.c.l.b16 %v282
    %v518 = vunpack.c.l.b16 %v283
    %v519 = vunpack.c.h.b16 %v283
    %v520 = vunpack.c.l.b16 %v284
    %v521 = vunpack.c.l.b16 %v285
    %v522 = vunpack.c.h.b16 %v285
    %v523 = vunpack.c.l.b16 %v286
    %v524 = vunpack.c.l.b16 %v287
    %v525 = vunpack.c.h.b16 %v287
    %v526 = vunpack.c.l.b16 %v288
    %v527 = vunpack.c.l.b16 %v289
    %v528 = vunpack.c.h.b16 %v289
    %v529 = vunpack.c.l.b16 %v290
    %v530 = vunpack.c.l.b16 %v291
    %v531 = vunpack.c.h.b16 %v291
    %v532 = vunpack.c.l.b16 %v292
    %v533 = vunpack.c.l.b16 %v293
    %v534 = vunpack.c.h.b16 %v293
    %v535 = vunpack.c.l.b16 %v294
    %v536 = vunpack.c.l.b16 %v295
    %v537 = vunpack.c.h.b16 %v295
    %v538 = vunpack.c.l.b16 %v296
    %v539 = vunpack.c.l.b16 %v297
    %v540 = vunpack.c.h.b16 %v297
    %v541 = vunpack.c.l.b16 %v298
    %v542 = vunpack.c.l.b16 %v299
    %v543 = vunpack.c.h.b16 %v299
    %v544 = vunpack.c.l.b16 %v300
    %v545 = vunpack.c.l.b16 %v301
    %v546 = vunpack.c.h.b16 %v301
    %v547 = vunpack.c.l.b16 %v302
    %v548 = vunpack.c.l.b16 %v303
    %v549 = vunpack.c.h.b16 %v303
    %v550 = vunpack.c.l.b16 %v304
    %v551 = vunpack.c.l.b16 %v305
    %v552 = vunpack.c.h.b16 %v305
    %v553 = vunpack.c.l.b16 %v306
    %v554 = vunpack.c.l.b16 %v307
    %v555 = vunpack.c.h.b16 %v307
    %v556 = vunpack.c.l.b16 %v308
    %v557 = vunpack.c.l.b16 %v309
    %v558 = vunpack.c.h.b16 %v309
    %v559 = vunpack.c.l.b16 %v310
    %v560 = vunpack.c.l.b16 %v311
    %v561 = vunpack.c.h.b16 %v311
    %v562 = vunpack.c.l.b16 %v312
    %v563 = vunpack.c.l.b16 %v313
    %v564 = vunpack.c.h.b16 %v313
    %v565 = vunpack.c.l.b16 %v314
    %v566 = vunpack.c.l.b16 %v315
    %v567 = vunpack.c.h.b16 %v315
    %v568 = vunpack.c.l.b16 %v316
    %v569 = vunpack.c.l.b16 %v317
    %v570 = vunpack.c.h.b16 %v317
    %v571 = vunpack.c.l.b16 %v318
    %v572 = vunpack.c.l.b16 %v319
    %v573 = vunpack.c.h.b16 %v319
    %v574 = vunpack.c.l.b16 %v320
    %v575 = vunpack.c.l.b16 %v321
    %v576 = vunpack.c.h.b16 %v321
    %v577 = vunpack.c.l.b16 %v322
    %v578 = vunpack.c.l.b16 %v323
    %v579 = vunpack.c.h.b16 %v323
    %v580 = vunpack.c.l.b16 %v324
    %v581 = vunpack.c.l.b16 %v325
    %v582 = vunpack.c.h.b16 %v325
    %v583 = vunpack.c.l.b16 %v326
    %v584 = vpack.c.b16 %v443, %v440
    %v585 = vpack.c.b16 %v444, %v441
    %v586 = vpack.c.b16 %v445, %v442
    %v587 = vpack.c.b16 %v449, %v446
    %v588 = vpack.c.b16 %v450, %v447
    %v589 = vpack.c.b16 %v451, %v448
    %v590 = vpack.c.b16 %v455, %v452
    %v591 = vpack.c.b16 %v456, %v453
    %v592 = vpack.c.b16 %v457, %v454
    %v593 = vpack.c.b16 %v461, %v458
    %v594 = vpack.c.b16 %v462, %v459
    %v595 = vpack.c.b16 %v463, %v460
    %v596 = vpack.c.b16 %v467, %v464
    %v597 = vpack.c.b16 %v468, %v465
    %v598 = vpack.c.b16 %v469, %v466
    %v599 = vpack.c.b16 %v473, %v470
    %v600 = vpack.c.b16 %v474, %v471
    %v601 = vpack.c.b16 %v475, %v472
    %v602 = vpack.c.b16 %v479, %v476
    %v603 = vpack.c.b16 %v480, %v477
    %v604 = vpack.c.b16 %v481, %v478
    %v605 = vpack.c.b16 %v485, %v482
    %v606 = vpack.c.b16 %v486, %v483
    %v607 = vpack.c.b16 %v487, %v484
    %v608 = vpack.c.b16 %v491, %v488
    %v609 = vpack.c.b16 %v492, %v489
    %v610 = vpack.c.b16 %v493, %v490
    %v611 = vpack.c.b16 %v497, %v494
    %v612 = vpack.c.b16 %v498, %v495
    %v613 = vpack.c.b16 %v499, %v496
    %v614 = vpack.c.b16 %v503, %v500
    %v615 = vpack.c.b16 %v504, %v501
    %v616 = vpack.c.b16 %v505, %v502
    %v617 = vpack.c.b16 %v509, %v506
    %v618 = vpack.c.b16 %v510, %v507
    %v619 = vpack.c.b16 %v511, %v508
    %v620 = vpack.c.b16 %v515, %v512
    %v621 = vpack.c.b16 %v516, %v513
    %v622 = vpack.c.b16 %v517, %v514
    %v623 = vpack.c.b16 %v521, %v518
    %v624 = vpack.c.b16 %v522, %v519
    %v625 = vpack.c.b16 %v523, %v520
    %v626 = vpack.c.b16 %v527, %v524
    %v627 = vpack.c.b16 %v528, %v525
    %v628 = vpack.c.b16 %v529, %v526
    %v629 = vpack.c.b16 %v533, %v530
    %v630 = vpack.c.b16 %v534, %v531
    %v631 = vpack.c.b16 %v535, %v532
    %v632 = vpack.c.b16 %v539, %v536
    %v633 = vpack.c.b16 %v540, %v537
    %v634 = vpack.c.b16 %v541, %v538
    %v635 = vpack.c.b16 %v545, %v542
    %v636 = vpack.c.b16 %v546, %v543
    %v637 = vpack.c.b16 %v547, %v544
    %v638 = vpack.c.b16 %v551, %v548
    %v639 = vpack.c.b16 %v552, %v549
    %v640 = vpack.c.b16 %v553, %v550
    %v641 = vpack.c.b16 %v557, %v554
    %v642 = vpack.c.b16 %v558, %v555
    %v643 = vpack.c.b16 %v559, %v556
    %v644 = vpack.c.b16 %v563, %v560
    %v645 = vpack.c.b16 %v564, %v561
    %v646 = vpack.c.b16 %v565, %v562
    %v647 = vpack.c.b16 %v569, %v566
    %v648 = vpack.c.b16 %v570, %v567
    %v649 = vpack.c.b16 %v571, %v568
    %v650 = vpack.c.b16 %v575, %v572
    %v651 = vpack.c.b16 %v576, %v573
    %v652 = vpack.c.b16 %v577, %v574
    %v653 = vpack.c.b16 %v581, %v578
    %v654 = vpack.c.b16 %v582, %v579
    %v655 = vpack.c.b16 %v583, %v580
    %728 = vmatprep.subr.bf16.mxu0 %v585
    %729 = vmatpush1.bf16.msra.mxu0 %v584
    %730 = vmatprep.subr.bf16.mxu0 %v588
    %731 = vmatpush1.bf16.msra.mxu0 %v587
    %732 = vmatprep.subr.bf16.mxu0 %v591
    %733 = vmatpush1.bf16.msra.mxu0 %v590
    %734 = vmatprep.subr.bf16.mxu0 %v594
    %735 = vmatpush1.bf16.msra.mxu0 %v593
    %736 = vmatprep.subr.bf16.mxu0 %v597
    %737 = vmatpush1.bf16.msra.mxu0 %v596
    %738 = vmatprep.subr.bf16.mxu0 %v600
    %739 = vmatpush1.bf16.msra.mxu0 %v599
    %740 = vmatprep.subr.bf16.mxu0 %v603
    %741 = vmatpush1.bf16.msra.mxu0 %v602
    %742 = vmatprep.subr.bf16.mxu0 %v606
    %743 = vmatpush1.bf16.msra.mxu0 %v605
    %744 = vmatprep.subr.bf16.mxu0 %v609
    %745 = vmatpush1.bf16.msra.mxu0 %v608
    %746 = vmatprep.subr.bf16.mxu0 %v612
    %747 = vmatpush1.bf16.msra.mxu0 %v611
    %748 = vmatprep.subr.bf16.mxu0 %v615
    %749 = vmatpush1.bf16.msra.mxu0 %v614
    %750 = vmatprep.subr.bf16.mxu0 %v618
    %751 = vmatpush1.bf16.msra.mxu0 %v617
    %752 = vmatprep.subr.bf16.mxu0 %v621
    %753 = vmatpush1.bf16.msra.mxu0 %v620
    %754 = vmatprep.subr.bf16.mxu0 %v624
    %755 = vmatpush1.bf16.msra.mxu0 %v623
    %756 = vmatprep.subr.bf16.mxu0 %v627
    %757 = vmatpush1.bf16.msra.mxu0 %v626
    %758 = vmatprep.subr.bf16.mxu0 %v630
    %759 = vmatpush1.bf16.msra.mxu0 %v629
    %760 = vmatprep.mubr.bf16.mxu0 %v229
    %761 = vmatmul.mubr.bf16.gmra.mrb[0].mxu0 %v228
    %v762 = vpop.f32.mrb[0].mxu0
    %v763 = vadd.f32 %v332, %v762
    %v764 = vpop.f32.mrb[0].mxu0
    %v765 = vadd.f32 %v336, %v764
    %v766 = vpop.f32.mrb[0].mxu0
    %v767 = vadd.f32 %v332, %v766
    %v768 = vpop.f32.mrb[0].mxu0
    %v769 = vadd.f32 %v336, %v768
    %770 = vdwg.mxu0
    %771 = vmatprep.subr.bf16.mxu0 %v633
    %772 = vmatpush1.bf16.msra.mxu0 %v632
    %773 = vmatprep.subr.bf16.mxu0 %v636
    %774 = vmatpush1.bf16.msra.mxu0 %v635
    %775 = vmatprep.subr.bf16.mxu0 %v639
    %776 = vmatpush1.bf16.msra.mxu0 %v638
    %777 = vmatprep.subr.bf16.mxu0 %v642
    %778 = vmatpush1.bf16.msra.mxu0 %v641
    %779 = vmatprep.subr.bf16.mxu0 %v645
    %780 = vmatpush1.bf16.msra.mxu0 %v644
    %781 = vmatprep.subr.bf16.mxu0 %v648
    %782 = vmatpush1.bf16.msra.mxu0 %v647
    %783 = vmatprep.subr.bf16.mxu0 %v651
    %784 = vmatpush1.bf16.msra.mxu0 %v650
    %785 = vmatprep.subr.bf16.mxu0 %v654
    %786 = vmatpush1.bf16.msra.mxu0 %v653
    %787 = vmatprep.subr.bf16.mxu0 0
    %788 = vmatpush1.bf16.msra.mxu0 0
    %789 = vmatprep.subr.bf16.mxu0 0
    %790 = vmatpush1.bf16.msra.mxu0 0
    %791 = vmatprep.subr.bf16.mxu0 0
    %792 = vmatpush1.bf16.msra.mxu0 0
    %793 = vmatprep.subr.bf16.mxu0 0
    %794 = vmatpush1.bf16.msra.mxu0 0
    %795 = vmatprep.subr.bf16.mxu0 0
    %796 = vmatpush1.bf16.msra.mxu0 0
    %797 = vmatprep.subr.bf16.mxu0 0
    %798 = vmatpush1.bf16.msra.mxu0 0
    %799 = vmatprep.subr.bf16.mxu0 0
    %800 = vmatpush1.bf16.msra.mxu0 0
    %801 = vmatprep.subr.bf16.mxu0 0
    %802 = vmatpush1.bf16.msra.mxu0 0
    %803 = vmatprep.mubr.bf16.mxu0 0
    %804 = vmatmul.mubr.bf16.gmra.mrb[0].mxu0 %v230
    %v805 = vpop.f32.mrb[0].mxu0
    %v806 = vadd.f32 %v763, %v805
    %v807 = vpop.f32.mrb[0].mxu0
    %v808 = vadd.f32 %v765, %v807
    %v809 = vpop.f32.mrb[0].mxu0
    %v810 = vadd.f32 %v767, %v809
    %v811 = vpop.f32.mrb[0].mxu0
    %v812 = vadd.f32 %v769, %v811
    %813 = vdwg.mxu0
    %814 = vmatprep.subr.bf16.mxu0 0
    %815 = vmatpush1.bf16.msra.mxu0 %v586
    %816 = vmatprep.subr.bf16.mxu0 0
    %817 = vmatpush1.bf16.msra.mxu0 %v589
    %818 = vmatprep.subr.bf16.mxu0 0
    %819 = vmatpush1.bf16.msra.mxu0 %v592
    %820 = vmatprep.subr.bf16.mxu0 0
    %821 = vmatpush1.bf16.msra.mxu0 %v595
    %822 = vmatprep.subr.bf16.mxu0 0
    %823 = vmatpush1.bf16.msra.mxu0 %v598
    %824 = vmatprep.subr.bf16.mxu0 0
    %825 = vmatpush1.bf16.msra.mxu0 %v601
    %826 = vmatprep.subr.bf16.mxu0 0
    %827 = vmatpush1.bf16.msra.mxu0 %v604
    %828 = vmatprep.subr.bf16.mxu0 0
    %829 = vmatpush1.bf16.msra.mxu0 %v607
    %830 = vmatprep.subr.bf16.mxu0 0
    %831 = vmatpush1.bf16.msra.mxu0 %v610
    %832 = vmatprep.subr.bf16.mxu0 0
    %833 = vmatpush1.bf16.msra.mxu0 %v613
    %834 = vmatprep.subr.bf16.mxu0 0
    %835 = vmatpush1.bf16.msra.mxu0 %v616
    %836 = vmatprep.subr.bf16.mxu0 0
    %837 = vmatpush1.bf16.msra.mxu0 %v619
    %838 = vmatprep.subr.bf16.mxu0 0
    %839 = vmatpush1.bf16.msra.mxu0 %v622
    %840 = vmatprep.subr.bf16.mxu0 0
    %841 = vmatpush1.bf16.msra.mxu0 %v625
    %842 = vmatprep.subr.bf16.mxu0 0
    %843 = vmatpush1.bf16.msra.mxu0 %v628
    %844 = vmatprep.subr.bf16.mxu0 0
    %845 = vmatpush1.bf16.msra.mxu0 %v631
    %846 = vmatprep.mubr.bf16.mxu0 %v229
    %847 = vmatmul.mubr.bf16.gmra.mrb[0].mxu0 %v228
    %v848 = vpop.f32.mrb[0].mxu0
    %v849 = vadd.f32 %v340, %v848
    %v850 = vpop.f32.mrb[0].mxu0
    %v851 = vpop.f32.mrb[0].mxu0
    %v852 = vadd.f32 %v340, %v851
    %v853 = vpop.f32.mrb[0].mxu0
    %854 = vdwg.mxu0
    %855 = vmatprep.subr.bf16.mxu0 0
    %856 = vmatpush1.bf16.msra.mxu0 %v634
    %857 = vmatprep.subr.bf16.mxu0 0
    %858 = vmatpush1.bf16.msra.mxu0 %v637
    %859 = vmatprep.subr.bf16.mxu0 0
    %860 = vmatpush1.bf16.msra.mxu0 %v640
    %861 = vmatprep.subr.bf16.mxu0 0
    %862 = vmatpush1.bf16.msra.mxu0 %v643
    %863 = vmatprep.subr.bf16.mxu0 0
    %864 = vmatpush1.bf16.msra.mxu0 %v646
    %865 = vmatprep.subr.bf16.mxu0 0
    %866 = vmatpush1.bf16.msra.mxu0 %v649
    %867 = vmatprep.subr.bf16.mxu0 0
    %868 = vmatpush1.bf16.msra.mxu0 %v652
    %869 = vmatprep.subr.bf16.mxu0 0
    %870 = vmatpush1.bf16.msra.mxu0 %v655
    %871 = vmatprep.subr.bf16.mxu0 0
    %872 = vmatpush1.bf16.msra.mxu0 0
    %873 = vmatprep.subr.bf16.mxu0 0
    %874 = vmatpush1.bf16.msra.mxu0 0
    %875 = vmatprep.subr.bf16.mxu0 0
    %876 = vmatpush1.bf16.msra.mxu0 0
    %877 = vmatprep.subr.bf16.mxu0 0
    %878 = vmatpush1.bf16.msra.mxu0 0
    %879 = vmatprep.subr.bf16.mxu0 0
    %880 = vmatpush1.bf16.msra.mxu0 0
    %881 = vmatprep.subr.bf16.mxu0 0
    %882 = vmatpush1.bf16.msra.mxu0 0
    %883 = vmatprep.subr.bf16.mxu0 0
    %884 = vmatpush1.bf16.msra.mxu0 0
    %885 = vmatprep.subr.bf16.mxu0 0
    %886 = vmatpush1.bf16.msra.mxu0 0
    %887 = vmatprep.mubr.bf16.mxu0 0
    %888 = vmatmul.mubr.bf16.gmra.mrb[0].mxu0 %v230
    %v889 = vpop.f32.mrb[0].mxu0
    %v890 = vadd.f32 %v849, %v889
    %v891 = vpop.f32.mrb[0].mxu0
    %v892 = vpop.f32.mrb[0].mxu0
    %v893 = vadd.f32 %v852, %v892
    %v894 = vpop.f32.mrb[0].mxu0
    %895 = vdwg.mxu0
    %v896 = vmax.f32 %v806, 0.0
    %v897 = vmax.f32 %v808, 0.0
    %v898 = vmax.f32 %v890, 0.0
    %v899 = vmax.f32 %v810, 0.0
    %v900 = vmax.f32 %v812, 0.0
    %v901 = vmax.f32 %v893, 0.0
    %v902 = vld [vmem:[%s5] sm:$0x7]
    %v904 = vlaneseq
    %v905 = vshrl.u32 %v904, 7
    %v906 = vsub.s32 0, %v905
    %v907 = vrot.slane %v902, %v906
    %v908 = vlaneseq
    %v909 = vshrl.u32 %v908, 7
    %v910 = vsub.s32 1, %v909
    %v911 = vrot.slane %v902, %v910
    %v912 = vlaneseq
    %v913 = vshrl.u32 %v912, 7
    %v914 = vsub.s32 2, %v913
    %v915 = vrot.slane %v902, %v914
    %v919 = vmul.f32 %v896, %v907
    %v920 = vmul.f32 %v897, %v911
    %v921 = vmul.f32 %v898, %v915
    %v922 = vmul.f32 %v899, %v907
    %v923 = vmul.f32 %v900, %v911
    %v924 = vmul.f32 %v901, %v915
    %v925 = vadd.f32 %v919, %v920
    %v926 = vadd.f32 %v925, %v921
    %927 = vadd.xlane.f32.xlu0 %v926
    %v928 = vpop.xlane.xlu0 %927
    %v929 = vadd.f32 %v922, %v923
    %v930 = vadd.f32 %v929, %v924
    %931 = vadd.xlane.f32.xlu0 %v930
    %v932 = vpop.xlane.xlu0 %931
    %s933 = sld [smem:[#allocation2]]
    %v934 = vstv %s933
    %v935 = vadd.f32 %v928, %v934
    %v936 = vadd.f32 %v932, %v934
    %v937 = vxor.u32 %v935, 2147483648
    %v938 = vxor.u32 %v936, 2147483648
    %v939 = vmul.f32 %v937, 1.442695
    %v940 = vpow.pop %v939
    %v941 = vmul.f32 %v938, 1.442695
    %v942 = vpow.pop %v941
    %v943 = vadd.f32 %v940, 1.0
    %v944 = vadd.f32 %v942, 1.0
    %v945 = vrcp.pop %v943
    %v946 = vmul.f32 1.0, %v945
    %v947 = vrcp.pop %v944
    %v948 = vmul.f32 1.0, %v947
    %v951 = vlaneseq
    %v952 = vand.u32 %v951, 127
    %v953 = vlaneseq
    %v954 = vshrl.u32 %v953, 7
    %v955 = vsub.s32 %v952, %v954
    %v956 = vrot.slane %v946, %v955
    %v957 = vadd.s32 %v952, 4294967288
    %v958 = vlaneseq
    %v959 = vshrl.u32 %v958, 7
    %v960 = vsub.s32 %v957, %v959
    %v961 = vrot.slane %v948, %v960
    %vm962 = vcmask 130112
    %v963 = vsel %vm962, %v961, %v956
    %vm965 = vcmask 122880
    %966 = vst.msk [vmem:[#allocation9] sm:$0x1] %vm965, %v963
    // Predicated region
    $region42: #{tpu_custom_call.1} parent=1 // pred_check
      _
    $region43: #{tpu_custom_call.1} parent=1 // pred_check_branch
      %968 = sbr.rel (0) target = $region45
    $region44: #{tpu_custom_call.1} parent=1 // pred_region
      %s970 = ssub.s32 16, 16
      %971 = vsyncadd [#allocation5], %s970
      %s973 = sshll.u32 [#allocation9], 4
      %s974 = int_to_ptr.vmem [resolvable:$true] %s973
      %976 = dma.vmem_to_hbm [thread:$0]  %s974, 16, %s7, [#allocation5]
    $region45: #{tpu_custom_call.1} parent=1 // pred_fallthru
      _
    // Predicated region
    $region46: #{tpu_custom_call.1} parent=1 // pred_check
      _
    $region47: #{tpu_custom_call.1} parent=1 // pred_check_branch
      %978 = sbr.rel (0) target = $region49
    $region48: #{tpu_custom_call.1} parent=1 // pred_region
      %979 = dma.done [#allocation5], 16
    $region49: #{tpu_custom_call.1} parent=1 // pred_fallthru
      _
    %980 = vsyncpa [#allocation4], 1
    %981 = vsyncpa [#allocation7], 1
    %982 = vsyncpa [#allocation5], 1

</llo_original>
